<compile_context>
chip_gen: v6e
topology: v6e:2x2x1
jax: 0.10.0
libtpu: 0.0.40
codegen_flags: <defaults>
</compile_context>

<pallas_src>
import jax
import jax.numpy as jnp
from jax.experimental import pallas as pl
from jax.experimental.pallas import tpu as pltpu

hidden_dim = 64
hidden_dim1 = 128
traj_length = 60
z_length = 5
IN_DIM = traj_length * 2      # 120
IN_PAD = 128                  # lane-padded input / decoded width
Z_PAD = 128                   # lane-padded latent block width (mu block / logvar block)


def _round_up(n, m):
    return (n + m - 1) // m * m


def vae_kernel(x_ref, eps_ref,
               w1_ref, b1_ref, w2_ref, b2_ref, w3_ref, b3_ref,
               w4_ref, b4_ref, w5_ref, b5_ref, w6_ref, b6_ref,
               dec_ref, mulv_ref):
    f32 = jnp.float32
    bf16 = jnp.bfloat16

    x = x_ref[...]                                                    # [TB, 128] bf16

    # ---- encoder: Linear -> ReLU -> Linear -> ReLU -> fused (mu|logvar) head ----
    h1 = jnp.dot(x, w1_ref[...], preferred_element_type=f32) + b1_ref[...]
    h1 = jnp.maximum(h1, 0.0)                                         # [TB, 128] f32
    h2 = jnp.dot(h1.astype(bf16), w2_ref[...], preferred_element_type=f32) + b2_ref[...]
    h2 = jnp.maximum(h2, 0.0)                                         # [TB, 64]  f32

    # fused head: [TB, 256]; cols 0:5 = mu, cols 128:133 = log_var, rest exact zeros
    h3 = jnp.dot(h2.astype(bf16), w3_ref[...], preferred_element_type=f32) + b3_ref[...]
    mulv_ref[...] = h3                                                # lane-dense store

    mu_pad = h3[:, :Z_PAD]                                            # [TB, 128]
    lv_pad = h3[:, Z_PAD:]                                            # [TB, 128]

    # ---- reparameterize (f32): z = mu + eps * exp(0.5 * log_var) ----
    # eps is zero-padded beyond z_length and mu/lv pads are exact zeros, so the
    # padded columns of z_pad are exactly zero and cannot perturb the decoder.
    z_pad = mu_pad + eps_ref[...] * jnp.exp(0.5 * lv_pad)             # [TB, 128]

    # ---- decoder: Linear -> ReLU -> Linear -> ReLU -> Linear ----
    d1 = jnp.dot(z_pad.astype(bf16), w4_ref[...], preferred_element_type=f32) + b4_ref[...]
    d1 = jnp.maximum(d1, 0.0)                                         # [TB, 64]
    d2 = jnp.dot(d1.astype(bf16), w5_ref[...], preferred_element_type=f32) + b5_ref[...]
    d2 = jnp.maximum(d2, 0.0)                                         # [TB, 128]
    dec = jnp.dot(d2.astype(bf16), w6_ref[...], preferred_element_type=f32) + b6_ref[...]
    dec_ref[...] = dec                                                # [TB, 128] lane-dense


def init_params(key):
    """Deterministic init matching PyTorch Linear shapes (stored as [in, out], f32)."""
    def linear(k, fan_in, fan_out):
        kw, kb = jax.random.split(k)
        bound = 1.0 / jnp.sqrt(fan_in)
        w = jax.random.uniform(kw, (fan_in, fan_out), jnp.float32, -bound, bound)
        b = jax.random.uniform(kb, (1, fan_out), jnp.float32, -bound, bound)
        return w, b

    keys = jax.random.split(key, 6)
    return (linear(keys[0], IN_DIM, hidden_dim1),        # 120 -> 128
            linear(keys[1], hidden_dim1, hidden_dim),    # 128 -> 64
            linear(keys[2], hidden_dim, 2 * z_length),   # 64  -> 10 (mu | logvar)
            linear(keys[3], z_length, hidden_dim),       # 5   -> 64
            linear(keys[4], hidden_dim, hidden_dim1),    # 64  -> 128
            linear(keys[5], hidden_dim1, IN_DIM))        # 128 -> 120


def pack_params(params):
    """Pad / fuse the f32 reference params into the kernel's bf16 lane-padded layout."""
    (w1, b1), (w2, b2), (w3, b3), (w4, b4), (w5, b5), (w6, b6) = params
    bf16 = jnp.bfloat16

    # layer 1: pad input rows 120 -> 128 with zeros
    w1p = jnp.zeros((IN_PAD, hidden_dim1), jnp.float32).at[:IN_DIM, :].set(w1).astype(bf16)

    # fused mu|logvar head padded to [64, 256]: mu -> cols 0:5, logvar -> cols 128:133
    w3p = jnp.zeros((hidden_dim, 2 * Z_PAD), jnp.float32)
    w3p = w3p.at[:, :z_length].set(w3[:, :z_length])
    w3p = w3p.at[:, Z_PAD:Z_PAD + z_length].set(w3[:, z_length:])
    b3p = jnp.zeros((1, 2 * Z_PAD), jnp.float32)
    b3p = b3p.at[:, :z_length].set(b3[:, :z_length])
    b3p = b3p.at[:, Z_PAD:Z_PAD + z_length].set(b3[:, z_length:])

    # decoder first layer: pad latent rows 5 -> 128 with zeros
    w4p = jnp.zeros((Z_PAD, hidden_dim), jnp.float32).at[:z_length, :].set(w4).astype(bf16)

    # decoder last layer: pad output cols 120 -> 128 with zeros
    w6p = jnp.zeros((hidden_dim1, IN_PAD), jnp.float32).at[:, :IN_DIM].set(w6).astype(bf16)
    b6p = jnp.zeros((1, IN_PAD), jnp.float32).at[:, :IN_DIM].set(b6)

    return (w1p, b1, w2.astype(bf16), b2, w3p.astype(bf16), b3p,
            w4p, b4, w5.astype(bf16), b5, w6p, b6p)


def vae_forward(x, kparams, eps, block_rows=1024):
    """Runs the fused VAE forward kernel. Returns (decoded, mu, log_var)."""
    x2 = x.reshape(-1, IN_DIM).astype(jnp.float32)          # x.view(-1, traj_length*2)
    B = x2.shape[0]
    TB = min(block_rows, _round_up(B, 8))                   # batch tile (multiple of 8)
    Bp = _round_up(B, TB)

    # lane-pad to 128 wide, batch-pad to a multiple of TB; matmul input in bf16
    x_pad = jnp.zeros((Bp, IN_PAD), jnp.float32).at[:B, :IN_DIM].set(x2).astype(jnp.bfloat16)
    eps_pad = jnp.zeros((Bp, Z_PAD), jnp.float32).at[:B, :z_length].set(eps)

    (w1, b1, w2, b2, w3, b3, w4, b4, w5, b5, w6, b6) = kparams
    weights = (w1, b1, w2, b2, w3, b3, w4, b4, w5, b5, w6, b6)

    grid = (Bp // TB,)

    def row_spec(width):
        return pl.BlockSpec((TB, width), lambda i: (i, 0))

    def resident(shape):
        nd = len(shape)
        return pl.BlockSpec(shape, lambda i, _nd=nd: (0,) * _nd)  # DMA'd once, stays in VMEM

    in_specs = [row_spec(IN_PAD), row_spec(Z_PAD)] + [resident(p.shape) for p in weights]
    out_specs = (row_spec(IN_PAD), row_spec(2 * Z_PAD))
    out_shape = (jax.ShapeDtypeStruct((Bp, IN_PAD), jnp.float32),      # decoded (padded)
                 jax.ShapeDtypeStruct((Bp, 2 * Z_PAD), jnp.float32))   # mu | logvar (padded)

    flops = 2 * Bp * (IN_PAD * hidden_dim1 + hidden_dim1 * hidden_dim
                      + hidden_dim * 2 * Z_PAD + Z_PAD * hidden_dim
                      + hidden_dim * hidden_dim1 + hidden_dim1 * IN_PAD)
    bytes_accessed = (int(x_pad.size) * 2 + int(eps_pad.size) * 4
                      + Bp * IN_PAD * 4 + Bp * 2 * Z_PAD * 4
                      + sum(int(p.size) * p.dtype.itemsize for p in weights))

    dec_pad, mulv = pl.pallas_call(
        vae_kernel,
        out_shape=out_shape,
        grid=grid,
        in_specs=in_specs,
        out_specs=out_specs,
        compiler_params=pltpu.CompilerParams(
            dimension_semantics=("parallel",)),
        cost_estimate=pl.CostEstimate(
            flops=flops, transcendentals=Bp * Z_PAD, bytes_accessed=bytes_accessed),
    )(x_pad, eps_pad, *weights)

    dec = dec_pad[:B, :IN_DIM]
    mu = mulv[:B, :z_length]
    log_var = mulv[:B, Z_PAD:Z_PAD + z_length]
    return dec, mu, log_var


def vae_forward_ref(x, params, eps):
    """Pure-JAX reference mimicking the kernel math (bf16 matmul operands, f32 accum)."""
    def mm(a, w):
        return jnp.dot(a.astype(jnp.bfloat16), w.astype(jnp.bfloat16),
                       preferred_element_type=jnp.float32)

    (w1, b1), (w2, b2), (w3, b3), (w4, b4), (w5, b5), (w6, b6) = params
    x2 = x.reshape(-1, IN_DIM).astype(jnp.float32)
    h = jnp.maximum(mm(x2, w1) + b1, 0.0)
    h = jnp.maximum(mm(h, w2) + b2, 0.0)
    enc = mm(h, w3) + b3
    mu, log_var = enc[:, :z_length], enc[:, z_length:]
    z = mu + eps * jnp.exp(0.5 * log_var)
    d = jnp.maximum(mm(z, w4) + b4, 0.0)
    d = jnp.maximum(mm(d, w5) + b5, 0.0)
    dec = mm(d, w6) + b6
    return dec, mu, log_var


if __name__ == "__main__":
    key = jax.random.PRNGKey(0)
    k_param, k_x, k_eps = jax.random.split(key, 3)

    B = 8
    # input trajectories: [B, traj_length, 2] (flattened inside forward, like x.view)
    x = jax.random.normal(k_x, (B, traj_length, 2), jnp.float32)
    # TODO(synk): torch.randn_like(std) is replaced by an explicit eps input (no
    # in-kernel RNG needed for a deterministic test).
    eps = jax.random.normal(k_eps, (B, z_length), jnp.float32)

    params = init_params(k_param)
    kparams = pack_params(params)

    dec, mu, log_var = vae_forward(x, kparams, eps)
    jax.block_until_ready((dec, mu, log_var))

    dec_r, mu_r, lv_r = vae_forward_ref(x, params, eps)
    assert dec.shape == (B, IN_DIM)
    assert mu.shape == (B, z_length) and log_var.shape == (B, z_length)
    assert jnp.allclose(dec, dec_r, atol=5e-3, rtol=5e-3), float(jnp.max(jnp.abs(dec - dec_r)))
    assert jnp.allclose(mu, mu_r, atol=5e-3, rtol=5e-3), float(jnp.max(jnp.abs(mu - mu_r)))
    assert jnp.allclose(log_var, lv_r, atol=5e-3, rtol=5e-3), float(jnp.max(jnp.abs(log_var - lv_r)))

    print("KERNEL_OK")
</pallas_src>

<mosaic_0001>
module attributes {stable_mosaic.version = 11 : i64} {
  func.func @vae_kernel(%arg0: i32, %arg1: memref<8x128xbf16, #tpu.memory_space<vmem>>, %arg2: memref<8x128xf32, #tpu.memory_space<vmem>>, %arg3: memref<128x128xbf16, #tpu.memory_space<vmem>>, %arg4: memref<1x128xf32, #tpu.memory_space<vmem>>, %arg5: memref<128x64xbf16, #tpu.memory_space<vmem>>, %arg6: memref<1x64xf32, #tpu.memory_space<vmem>>, %arg7: memref<64x256xbf16, #tpu.memory_space<vmem>>, %arg8: memref<1x256xf32, #tpu.memory_space<vmem>>, %arg9: memref<128x64xbf16, #tpu.memory_space<vmem>>, %arg10: memref<1x64xf32, #tpu.memory_space<vmem>>, %arg11: memref<64x128xbf16, #tpu.memory_space<vmem>>, %arg12: memref<1x128xf32, #tpu.memory_space<vmem>>, %arg13: memref<128x128xbf16, #tpu.memory_space<vmem>>, %arg14: memref<1x128xf32, #tpu.memory_space<vmem>>, %arg15: memref<8x128xf32, #tpu.memory_space<vmem>>, %arg16: memref<8x256xf32, #tpu.memory_space<vmem>>) attributes {dimension_semantics = [#tpu.dimension_semantics<parallel>], iteration_bounds = array<i64: 1>, scalar_prefetch = 0 : i64, scratch_operands = 0 : i64, tpu.core_type = #tpu.core_type<tc>, window_params = [{transform_indices = @transform_0, window_bounds = array<i64: 8, 128>}, {transform_indices = @transform_1, window_bounds = array<i64: 8, 128>}, {pipeline_mode = #tpu.pipeline_mode<synchronous>, transform_indices = @transform_2, window_bounds = array<i64: 128, 128>}, {pipeline_mode = #tpu.pipeline_mode<synchronous>, transform_indices = @transform_3, window_bounds = array<i64: 1, 128>}, {pipeline_mode = #tpu.pipeline_mode<synchronous>, transform_indices = @transform_4, window_bounds = array<i64: 128, 64>}, {pipeline_mode = #tpu.pipeline_mode<synchronous>, transform_indices = @transform_5, window_bounds = array<i64: 1, 64>}, {pipeline_mode = #tpu.pipeline_mode<synchronous>, transform_indices = @transform_6, window_bounds = array<i64: 64, 256>}, {pipeline_mode = #tpu.pipeline_mode<synchronous>, transform_indices = @transform_7, window_bounds = array<i64: 1, 256>}, {pipeline_mode = #tpu.pipeline_mode<synchronous>, transform_indices = @transform_8, window_bounds = array<i64: 128, 64>}, {pipeline_mode = #tpu.pipeline_mode<synchronous>, transform_indices = @transform_9, window_bounds = array<i64: 1, 64>}, {pipeline_mode = #tpu.pipeline_mode<synchronous>, transform_indices = @transform_10, window_bounds = array<i64: 64, 128>}, {pipeline_mode = #tpu.pipeline_mode<synchronous>, transform_indices = @transform_11, window_bounds = array<i64: 1, 128>}, {pipeline_mode = #tpu.pipeline_mode<synchronous>, transform_indices = @transform_12, window_bounds = array<i64: 128, 128>}, {pipeline_mode = #tpu.pipeline_mode<synchronous>, transform_indices = @transform_13, window_bounds = array<i64: 1, 128>}, {transform_indices = @transform_14, window_bounds = array<i64: 8, 128>}, {transform_indices = @transform_15, window_bounds = array<i64: 8, 256>}]} {
    %c0 = arith.constant 0 : index
    %c0_0 = arith.constant 0 : index
    %0 = vector.load %arg1[%c0, %c0_0] : memref<8x128xbf16, #tpu.memory_space<vmem>>, vector<8x128xbf16>
    %c0_1 = arith.constant 0 : index
    %c0_2 = arith.constant 0 : index
    %1 = vector.load %arg3[%c0_1, %c0_2] : memref<128x128xbf16, #tpu.memory_space<vmem>>, vector<128x128xbf16>
    %cst = arith.constant dense<0.000000e+00> : vector<8x128xf32>
    %2 = tpu.matmul %0, %1, %cst {dimension_numbers = #tpu.dot_dimension_numbers<[1], [0], [0], [1], [0, 0, 1, 1], [], []>} : vector<8x128xbf16>, vector<128x128xbf16>, vector<8x128xf32> -> vector<8x128xf32>
    %c0_3 = arith.constant 0 : index
    %c0_4 = arith.constant 0 : index
    %3 = vector.load %arg4[%c0_3, %c0_4] : memref<1x128xf32, #tpu.memory_space<vmem>>, vector<1x128xf32>
    %4 = vector.broadcast %3 : vector<1x128xf32> to vector<8x128xf32>
    %5 = arith.addf %2, %4 : vector<8x128xf32>
    %cst_5 = arith.constant 0.000000e+00 : f32
    %6 = vector.broadcast %cst_5 : f32 to vector<8x128xf32>
    %7 = arith.maximumf %5, %6 : vector<8x128xf32>
    %8 = arith.truncf %7 : vector<8x128xf32> to vector<8x128xbf16>
    %c0_6 = arith.constant 0 : index
    %c0_7 = arith.constant 0 : index
    %9 = vector.load %arg5[%c0_6, %c0_7] : memref<128x64xbf16, #tpu.memory_space<vmem>>, vector<128x64xbf16>
    %cst_8 = arith.constant dense<0.000000e+00> : vector<8x64xf32>
    %10 = tpu.matmul %8, %9, %cst_8 {dimension_numbers = #tpu.dot_dimension_numbers<[1], [0], [0], [1], [0, 0, 1, 1], [], []>} : vector<8x128xbf16>, vector<128x64xbf16>, vector<8x64xf32> -> vector<8x64xf32>
    %c0_9 = arith.constant 0 : index
    %c0_10 = arith.constant 0 : index
    %11 = vector.load %arg6[%c0_9, %c0_10] : memref<1x64xf32, #tpu.memory_space<vmem>>, vector<1x64xf32>
    %12 = vector.broadcast %11 : vector<1x64xf32> to vector<8x64xf32>
    %13 = arith.addf %10, %12 : vector<8x64xf32>
    %cst_11 = arith.constant 0.000000e+00 : f32
    %14 = vector.broadcast %cst_11 : f32 to vector<8x64xf32>
    %15 = arith.maximumf %13, %14 : vector<8x64xf32>
    %16 = arith.truncf %15 : vector<8x64xf32> to vector<8x64xbf16>
    %c0_12 = arith.constant 0 : index
    %c0_13 = arith.constant 0 : index
    %17 = vector.load %arg7[%c0_12, %c0_13] : memref<64x256xbf16, #tpu.memory_space<vmem>>, vector<64x256xbf16>
    %cst_14 = arith.constant dense<0.000000e+00> : vector<8x256xf32>
    %18 = tpu.matmul %16, %17, %cst_14 {dimension_numbers = #tpu.dot_dimension_numbers<[1], [0], [0], [1], [0, 0, 1, 1], [], []>} : vector<8x64xbf16>, vector<64x256xbf16>, vector<8x256xf32> -> vector<8x256xf32>
    %c0_15 = arith.constant 0 : index
    %c0_16 = arith.constant 0 : index
    %19 = vector.load %arg8[%c0_15, %c0_16] : memref<1x256xf32, #tpu.memory_space<vmem>>, vector<1x256xf32>
    %20 = vector.broadcast %19 : vector<1x256xf32> to vector<8x256xf32>
    %21 = arith.addf %18, %20 : vector<8x256xf32>
    %c0_17 = arith.constant 0 : index
    %c0_18 = arith.constant 0 : index
    %22 = vector.load %arg16[%c0_17, %c0_18] : memref<8x256xf32, #tpu.memory_space<vmem>>, vector<8x256xf32>
    tpu.vector_store %arg16[%c0_17, %c0_18], %21 {strides = array<i32>} : memref<8x256xf32, #tpu.memory_space<vmem>>, vector<8x256xf32>,
    %23 = vector.extract_strided_slice %21 {offsets = [0, 0], sizes = [8, 128], strides = [1, 1]} : vector<8x256xf32> to vector<8x128xf32>
    %24 = vector.extract_strided_slice %21 {offsets = [0, 128], sizes = [8, 128], strides = [1, 1]} : vector<8x256xf32> to vector<8x128xf32>
    %c0_19 = arith.constant 0 : index
    %c0_20 = arith.constant 0 : index
    %25 = vector.load %arg2[%c0_19, %c0_20] : memref<8x128xf32, #tpu.memory_space<vmem>>, vector<8x128xf32>
    %cst_21 = arith.constant 5.000000e-01 : f32
    %26 = vector.broadcast %cst_21 : f32 to vector<8x128xf32>
    %27 = arith.mulf %26, %24 : vector<8x128xf32>
    %28 = math.exp %27 : vector<8x128xf32>
    %29 = arith.mulf %25, %28 : vector<8x128xf32>
    %30 = arith.addf %23, %29 : vector<8x128xf32>
    %31 = arith.truncf %30 : vector<8x128xf32> to vector<8x128xbf16>
    %c0_22 = arith.constant 0 : index
    %c0_23 = arith.constant 0 : index
    %32 = vector.load %arg9[%c0_22, %c0_23] : memref<128x64xbf16, #tpu.memory_space<vmem>>, vector<128x64xbf16>
    %cst_24 = arith.constant dense<0.000000e+00> : vector<8x64xf32>
    %33 = tpu.matmul %31, %32, %cst_24 {dimension_numbers = #tpu.dot_dimension_numbers<[1], [0], [0], [1], [0, 0, 1, 1], [], []>} : vector<8x128xbf16>, vector<128x64xbf16>, vector<8x64xf32> -> vector<8x64xf32>
    %c0_25 = arith.constant 0 : index
    %c0_26 = arith.constant 0 : index
    %34 = vector.load %arg10[%c0_25, %c0_26] : memref<1x64xf32, #tpu.memory_space<vmem>>, vector<1x64xf32>
    %35 = vector.broadcast %34 : vector<1x64xf32> to vector<8x64xf32>
    %36 = arith.addf %33, %35 : vector<8x64xf32>
    %cst_27 = arith.constant 0.000000e+00 : f32
    %37 = vector.broadcast %cst_27 : f32 to vector<8x64xf32>
    %38 = arith.maximumf %36, %37 : vector<8x64xf32>
    %39 = arith.truncf %38 : vector<8x64xf32> to vector<8x64xbf16>
    %c0_28 = arith.constant 0 : index
    %c0_29 = arith.constant 0 : index
    %40 = vector.load %arg11[%c0_28, %c0_29] : memref<64x128xbf16, #tpu.memory_space<vmem>>, vector<64x128xbf16>
    %cst_30 = arith.constant dense<0.000000e+00> : vector<8x128xf32>
    %41 = tpu.matmul %39, %40, %cst_30 {dimension_numbers = #tpu.dot_dimension_numbers<[1], [0], [0], [1], [0, 0, 1, 1], [], []>} : vector<8x64xbf16>, vector<64x128xbf16>, vector<8x128xf32> -> vector<8x128xf32>
    %c0_31 = arith.constant 0 : index
    %c0_32 = arith.constant 0 : index
    %42 = vector.load %arg12[%c0_31, %c0_32] : memref<1x128xf32, #tpu.memory_space<vmem>>, vector<1x128xf32>
    %43 = vector.broadcast %42 : vector<1x128xf32> to vector<8x128xf32>
    %44 = arith.addf %41, %43 : vector<8x128xf32>
    %cst_33 = arith.constant 0.000000e+00 : f32
    %45 = vector.broadcast %cst_33 : f32 to vector<8x128xf32>
    %46 = arith.maximumf %44, %45 : vector<8x128xf32>
    %47 = arith.truncf %46 : vector<8x128xf32> to vector<8x128xbf16>
    %c0_34 = arith.constant 0 : index
    %c0_35 = arith.constant 0 : index
    %48 = vector.load %arg13[%c0_34, %c0_35] : memref<128x128xbf16, #tpu.memory_space<vmem>>, vector<128x128xbf16>
    %cst_36 = arith.constant dense<0.000000e+00> : vector<8x128xf32>
    %49 = tpu.matmul %47, %48, %cst_36 {dimension_numbers = #tpu.dot_dimension_numbers<[1], [0], [0], [1], [0, 0, 1, 1], [], []>} : vector<8x128xbf16>, vector<128x128xbf16>, vector<8x128xf32> -> vector<8x128xf32>
    %c0_37 = arith.constant 0 : index
    %c0_38 = arith.constant 0 : index
    %50 = vector.load %arg14[%c0_37, %c0_38] : memref<1x128xf32, #tpu.memory_space<vmem>>, vector<1x128xf32>
    %51 = vector.broadcast %50 : vector<1x128xf32> to vector<8x128xf32>
    %52 = arith.addf %49, %51 : vector<8x128xf32>
    %c0_39 = arith.constant 0 : index
    %c0_40 = arith.constant 0 : index
    %53 = vector.load %arg15[%c0_39, %c0_40] : memref<8x128xf32, #tpu.memory_space<vmem>>, vector<8x128xf32>
    tpu.vector_store %arg15[%c0_39, %c0_40], %52 {strides = array<i32>} : memref<8x128xf32, #tpu.memory_space<vmem>>, vector<8x128xf32>,
    return
  }
  func.func @transform_0(%arg0: i32) -> (i32, i32) {
    %c0_i32 = arith.constant 0 : i32
    %c0_i32_0 = arith.constant 0 : i32
    return %arg0, %c0_i32 : i32, i32
  }
  func.func @transform_1(%arg0: i32) -> (i32, i32) {
    %c0_i32 = arith.constant 0 : i32
    %c0_i32_0 = arith.constant 0 : i32
    return %arg0, %c0_i32 : i32, i32
  }
  func.func @transform_2(%arg0: i32) -> (i32, i32) {
    %c0_i32 = arith.constant 0 : i32
    %c0_i32_0 = arith.constant 0 : i32
    %c0_i32_1 = arith.constant 0 : i32
    return %c0_i32, %c0_i32_0 : i32, i32
  }
  func.func @transform_3(%arg0: i32) -> (i32, i32) {
    %c0_i32 = arith.constant 0 : i32
    %c0_i32_0 = arith.constant 0 : i32
    %c0_i32_1 = arith.constant 0 : i32
    return %c0_i32, %c0_i32_0 : i32, i32
  }
  func.func @transform_4(%arg0: i32) -> (i32, i32) {
    %c0_i32 = arith.constant 0 : i32
    %c0_i32_0 = arith.constant 0 : i32
    %c0_i32_1 = arith.constant 0 : i32
    return %c0_i32, %c0_i32_0 : i32, i32
  }
  func.func @transform_5(%arg0: i32) -> (i32, i32) {
    %c0_i32 = arith.constant 0 : i32
    %c0_i32_0 = arith.constant 0 : i32
    %c0_i32_1 = arith.constant 0 : i32
    return %c0_i32, %c0_i32_0 : i32, i32
  }
  func.func @transform_6(%arg0: i32) -> (i32, i32) {
    %c0_i32 = arith.constant 0 : i32
    %c0_i32_0 = arith.constant 0 : i32
    %c0_i32_1 = arith.constant 0 : i32
    return %c0_i32, %c0_i32_0 : i32, i32
  }
  func.func @transform_7(%arg0: i32) -> (i32, i32) {
    %c0_i32 = arith.constant 0 : i32
    %c0_i32_0 = arith.constant 0 : i32
    %c0_i32_1 = arith.constant 0 : i32
    return %c0_i32, %c0_i32_0 : i32, i32
  }
  func.func @transform_8(%arg0: i32) -> (i32, i32) {
    %c0_i32 = arith.constant 0 : i32
    %c0_i32_0 = arith.constant 0 : i32
    %c0_i32_1 = arith.constant 0 : i32
    return %c0_i32, %c0_i32_0 : i32, i32
  }
  func.func @transform_9(%arg0: i32) -> (i32, i32) {
    %c0_i32 = arith.constant 0 : i32
    %c0_i32_0 = arith.constant 0 : i32
    %c0_i32_1 = arith.constant 0 : i32
    return %c0_i32, %c0_i32_0 : i32, i32
  }
  func.func @transform_10(%arg0: i32) -> (i32, i32) {
    %c0_i32 = arith.constant 0 : i32
    %c0_i32_0 = arith.constant 0 : i32
    %c0_i32_1 = arith.constant 0 : i32
    return %c0_i32, %c0_i32_0 : i32, i32
  }
  func.func @transform_11(%arg0: i32) -> (i32, i32) {
    %c0_i32 = arith.constant 0 : i32
    %c0_i32_0 = arith.constant 0 : i32
    %c0_i32_1 = arith.constant 0 : i32
    return %c0_i32, %c0_i32_0 : i32, i32
  }
  func.func @transform_12(%arg0: i32) -> (i32, i32) {
    %c0_i32 = arith.constant 0 : i32
    %c0_i32_0 = arith.constant 0 : i32
    %c0_i32_1 = arith.constant 0 : i32
    return %c0_i32, %c0_i32_0 : i32, i32
  }
  func.func @transform_13(%arg0: i32) -> (i32, i32) {
    %c0_i32 = arith.constant 0 : i32
    %c0_i32_0 = arith.constant 0 : i32
    %c0_i32_1 = arith.constant 0 : i32
    return %c0_i32, %c0_i32_0 : i32, i32
  }
  func.func @transform_14(%arg0: i32) -> (i32, i32) {
    %c0_i32 = arith.constant 0 : i32
    %c0_i32_0 = arith.constant 0 : i32
    return %arg0, %c0_i32 : i32, i32
  }
  func.func @transform_15(%arg0: i32) -> (i32, i32) {
    %c0_i32 = arith.constant 0 : i32
    %c0_i32_0 = arith.constant 0 : i32
    return %arg0, %c0_i32 : i32, i32
  }
}

</mosaic_0001>

<llo_original>
// kernel: tpu_custom_call.1
$region0: #{tpu_custom_call.1}
  #allocation0 [shape = 'u32[]', space=smem, size = 0x4, offset = 0x4, fixed_abs, tag = 'smem constant byte address 0x4 - core index']
  #allocation1 [shape = 'u32[144,128]{1,0:T(1,128)}', space=vmem, size = 0x12000, scoped, tag = 'internal scratch']
  %s0 = inlined_call_operand.hbm [shape: bf16[8,128], index: 0, kind: input, shape index: {}]
  %s1 = inlined_call_operand.hbm [shape: f32[8,128], index: 1, kind: input, shape index: {}]
  %s2 = inlined_call_operand.vmem [shape: bf16[128,128], index: 2, kind: input, shape index: {}]
  %s3 = inlined_call_operand.vmem [shape: f32[1,128], index: 3, kind: input, shape index: {}]
  %s4 = inlined_call_operand.vmem [shape: bf16[128,64], index: 4, kind: input, shape index: {}]
  %s5 = inlined_call_operand.vmem [shape: f32[1,64], index: 5, kind: input, shape index: {}]
  %s6 = inlined_call_operand.vmem [shape: bf16[64,256], index: 6, kind: input, shape index: {}]
  %s7 = inlined_call_operand.vmem [shape: f32[1,256], index: 7, kind: input, shape index: {}]
  %s8 = inlined_call_operand.vmem [shape: bf16[128,64], index: 8, kind: input, shape index: {}]
  %s9 = inlined_call_operand.vmem [shape: f32[1,64], index: 9, kind: input, shape index: {}]
  %s10 = inlined_call_operand.hbm [shape: bf16[64,128], index: 10, kind: input, shape index: {}]
  %s11 = inlined_call_operand.vmem [shape: f32[1,128], index: 11, kind: input, shape index: {}]
  %s12 = inlined_call_operand.vmem [shape: bf16[128,128], index: 12, kind: input, shape index: {}]
  %s13 = inlined_call_operand.vmem [shape: f32[1,128], index: 13, kind: input, shape index: {}]
  %s14 = inlined_call_operand.hbm [shape: f32[8,128], index: 14, kind: output, shape index: {0}]
  %s15 = inlined_call_operand.hbm [shape: f32[8,256], index: 15, kind: output, shape index: {1}]
  %16 = xla_tuple %s14, %s15
  %s17 = sld [smem:[#allocation0]]
  $region86: #{tpu_custom_call.1} parent=0
    _
  %s19 = ssub.s32 1, %s17
  %s20 = scalar_select 0, %s19, %s17
  $region1: #{tpu_custom_call.1} parent=0
    #allocation2 [shape = 'u8[2048]{0}', space=vmem, size = 0x800, scoped, tag = 'input window, operand 0, single buffered']
    #allocation3 [shape = 's32[1]{0}', space=sflag, size = 0x4, scoped, tag = 'scoped memory for tpu_custom_call.1']
    #allocation4 [shape = 's32[1]{0}', space=sflag, size = 0x4, scoped, tag = 'scoped memory for tpu_custom_call.1']
    #allocation5 [shape = 'u8[4096]{0}', space=vmem, size = 0x1000, scoped, tag = 'input window, operand 1, single buffered']
    #allocation6 [shape = 's32[1]{0}', space=sflag, size = 0x4, scoped, tag = 'scoped memory for tpu_custom_call.1']
    #allocation7 [shape = 'u8[16384]{0}', space=vmem, size = 0x4000, scoped, tag = 'input window, operand 10, single buffered']
    #allocation8 [shape = 'u8[4096]{0}', space=vmem, size = 0x1000, scoped, tag = 'output window, operand 0, single buffered']
    #allocation9 [shape = 'u8[8192]{0}', space=vmem, size = 0x2000, scoped, tag = 'output window, operand 1, single buffered']
    #allocation10 [shape = 's32[1]{0}', space=sflag, size = 0x4, scoped, tag = 'scoped memory for tpu_custom_call.1']
    %21 = vsyncpa [#allocation3], 0
    %22 = vsyncpa [#allocation6], 0
    %23 = vsyncpa [#allocation4], 0
    %24 = vsyncpa [#allocation10], 0
    // Predicated region
    $region2: #{tpu_custom_call.1} parent=1 // pred_check
      _
    $region3: #{tpu_custom_call.1} parent=1 // pred_check_branch
      %26 = sbr.rel (0) target = $region5
    $region4: #{tpu_custom_call.1} parent=1 // pred_region
      %s28 = ssub.s32 64, 64
      %29 = vsyncadd [#allocation3], %s28
      %s31 = sshll.u32 [#allocation2], 4
      %s32 = int_to_ptr.vmem [resolvable:$true] %s31
      %34 = dma.hbm_to_vmem [thread:$0]  %s0, 64, %s32, [#allocation3]
    $region5: #{tpu_custom_call.1} parent=1 // pred_fallthru
      _
    // Predicated region
    $region6: #{tpu_custom_call.1} parent=1 // pred_check
      _
    $region7: #{tpu_custom_call.1} parent=1 // pred_check_branch
      %36 = sbr.rel (0) target = $region9
    $region8: #{tpu_custom_call.1} parent=1 // pred_region
      %s38 = ssub.s32 128, 128
      %39 = vsyncadd [#allocation6], %s38
      %s41 = sshll.u32 [#allocation5], 4
      %s42 = int_to_ptr.vmem [resolvable:$true] %s41
      %44 = dma.hbm_to_vmem [thread:$0]  %s1, 128, %s42, [#allocation6]
    $region9: #{tpu_custom_call.1} parent=1 // pred_fallthru
      _
    // Predicated region
    $region10: #{tpu_custom_call.1} parent=1 // pred_check
      _
    $region11: #{tpu_custom_call.1} parent=1 // pred_check_branch
      %46 = sbr.rel (0) target = $region13
    $region12: #{tpu_custom_call.1} parent=1 // pred_region
      _
    $region13: #{tpu_custom_call.1} parent=1 // pred_fallthru
      _
    // Predicated region
    $region14: #{tpu_custom_call.1} parent=1 // pred_check
      _
    $region15: #{tpu_custom_call.1} parent=1 // pred_check_branch
      %48 = sbr.rel (0) target = $region17
    $region16: #{tpu_custom_call.1} parent=1 // pred_region
      _
    $region17: #{tpu_custom_call.1} parent=1 // pred_fallthru
      _
    // Predicated region
    $region18: #{tpu_custom_call.1} parent=1 // pred_check
      _
    $region19: #{tpu_custom_call.1} parent=1 // pred_check_branch
      %50 = sbr.rel (0) target = $region21
    $region20: #{tpu_custom_call.1} parent=1 // pred_region
      _
    $region21: #{tpu_custom_call.1} parent=1 // pred_fallthru
      _
    // Predicated region
    $region22: #{tpu_custom_call.1} parent=1 // pred_check
      _
    $region23: #{tpu_custom_call.1} parent=1 // pred_check_branch
      %52 = sbr.rel (0) target = $region25
    $region24: #{tpu_custom_call.1} parent=1 // pred_region
      _
    $region25: #{tpu_custom_call.1} parent=1 // pred_fallthru
      _
    // Predicated region
    $region26: #{tpu_custom_call.1} parent=1 // pred_check
      _
    $region27: #{tpu_custom_call.1} parent=1 // pred_check_branch
      %54 = sbr.rel (0) target = $region29
    $region28: #{tpu_custom_call.1} parent=1 // pred_region
      _
    $region29: #{tpu_custom_call.1} parent=1 // pred_fallthru
      _
    // Predicated region
    $region30: #{tpu_custom_call.1} parent=1 // pred_check
      _
    $region31: #{tpu_custom_call.1} parent=1 // pred_check_branch
      %56 = sbr.rel (0) target = $region33
    $region32: #{tpu_custom_call.1} parent=1 // pred_region
      _
    $region33: #{tpu_custom_call.1} parent=1 // pred_fallthru
      _
    // Predicated region
    $region34: #{tpu_custom_call.1} parent=1 // pred_check
      _
    $region35: #{tpu_custom_call.1} parent=1 // pred_check_branch
      %58 = sbr.rel (0) target = $region37
    $region36: #{tpu_custom_call.1} parent=1 // pred_region
      _
    $region37: #{tpu_custom_call.1} parent=1 // pred_fallthru
      _
    // Predicated region
    $region38: #{tpu_custom_call.1} parent=1 // pred_check
      _
    $region39: #{tpu_custom_call.1} parent=1 // pred_check_branch
      %60 = sbr.rel (0) target = $region41
    $region40: #{tpu_custom_call.1} parent=1 // pred_region
      _
    $region41: #{tpu_custom_call.1} parent=1 // pred_fallthru
      _
    // Predicated region
    $region42: #{tpu_custom_call.1} parent=1 // pred_check
      _
    $region43: #{tpu_custom_call.1} parent=1 // pred_check_branch
      %62 = sbr.rel (0) target = $region45
    $region44: #{tpu_custom_call.1} parent=1 // pred_region
      %s64 = ssub.s32 512, 512
      %65 = vsyncadd [#allocation6], %s64
      %s66 = sshll.u32 [#allocation7], 4
      %s67 = int_to_ptr.vmem [resolvable:$true] %s66
      %72 = dma.hbm_to_vmem [thread:$0]  %s10, 512, %s67, [#allocation6], 64, 64, 4
    $region45: #{tpu_custom_call.1} parent=1 // pred_fallthru
      _
    // Predicated region
    $region46: #{tpu_custom_call.1} parent=1 // pred_check
      _
    $region47: #{tpu_custom_call.1} parent=1 // pred_check_branch
      %74 = sbr.rel (0) target = $region49
    $region48: #{tpu_custom_call.1} parent=1 // pred_region
      _
    $region49: #{tpu_custom_call.1} parent=1 // pred_fallthru
      _
    // Predicated region
    $region50: #{tpu_custom_call.1} parent=1 // pred_check
      _
    $region51: #{tpu_custom_call.1} parent=1 // pred_check_branch
      %76 = sbr.rel (0) target = $region53
    $region52: #{tpu_custom_call.1} parent=1 // pred_region
      _
    $region53: #{tpu_custom_call.1} parent=1 // pred_fallthru
      _
    // Predicated region
    $region54: #{tpu_custom_call.1} parent=1 // pred_check
      _
    $region55: #{tpu_custom_call.1} parent=1 // pred_check_branch
      %78 = sbr.rel (0) target = $region57
    $region56: #{tpu_custom_call.1} parent=1 // pred_region
      _
    $region57: #{tpu_custom_call.1} parent=1 // pred_fallthru
      _
    // Predicated region
    $region58: #{tpu_custom_call.1} parent=1 // pred_check
      _
    $region59: #{tpu_custom_call.1} parent=1 // pred_check_branch
      %80 = sbr.rel (0) target = $region61
    $region60: #{tpu_custom_call.1} parent=1 // pred_region
      %81 = dma.done [#allocation3], 64
    $region61: #{tpu_custom_call.1} parent=1 // pred_fallthru
      _
    // Predicated region
    $region62: #{tpu_custom_call.1} parent=1 // pred_check
      _
    $region63: #{tpu_custom_call.1} parent=1 // pred_check_branch
      %83 = sbr.rel (0) target = $region65
    $region64: #{tpu_custom_call.1} parent=1 // pred_region
      %84 = dma.done [#allocation6], 128
    $region65: #{tpu_custom_call.1} parent=1 // pred_fallthru
      _
    // Predicated region
    $region66: #{tpu_custom_call.1} parent=1 // pred_check
      _
    $region67: #{tpu_custom_call.1} parent=1 // pred_check_branch
      %86 = sbr.rel (0) target = $region69
    $region68: #{tpu_custom_call.1} parent=1 // pred_region
      %87 = dma.done [#allocation6], 512
    $region69: #{tpu_custom_call.1} parent=1 // pred_fallthru
      _
    %v89 = vld [vmem:[#allocation2] sm:$0xf]
    %v90 = vld [vmem:[%s2] sm:$0xf]
    %v91 = vld [vmem:[%s2 + $0x4] sm:$0xf]
    %v92 = vld [vmem:[%s2 + $0x8] sm:$0xf]
    %v93 = vld [vmem:[%s2 + $0xc] sm:$0xf]
    %v94 = vld [vmem:[%s2 + $0x10] sm:$0xf]
    %v95 = vld [vmem:[%s2 + $0x14] sm:$0xf]
    %v96 = vld [vmem:[%s2 + $0x18] sm:$0xf]
    %v97 = vld [vmem:[%s2 + $0x1c] sm:$0xf]
    %v98 = vld [vmem:[%s2 + $0x20] sm:$0xf]
    %v99 = vld [vmem:[%s2 + $0x24] sm:$0xf]
    %v100 = vld [vmem:[%s2 + $0x28] sm:$0xf]
    %v101 = vld [vmem:[%s2 + $0x2c] sm:$0xf]
    %v102 = vld [vmem:[%s2 + $0x30] sm:$0xf]
    %v103 = vld [vmem:[%s2 + $0x34] sm:$0xf]
    %v104 = vld [vmem:[%s2 + $0x38] sm:$0xf]
    %v105 = vld [vmem:[%s2 + $0x3c] sm:$0xf]
    %v106 = vld [vmem:[%s3] sm:$0x1]
    %v108 = vlaneseq
    %v109 = vshrl.u32 %v108, 7
    %v110 = vsub.s32 0, %v109
    %v111 = vrot.slane %v106, %v110
    %v129 = vunpack.c.l.b16 %v90
    %v130 = vunpack.c.l.b16 %v91
    %v131 = vunpack.c.l.b16 %v92
    %v132 = vunpack.c.l.b16 %v93
    %v133 = vunpack.c.l.b16 %v94
    %v134 = vunpack.c.l.b16 %v95
    %v135 = vunpack.c.l.b16 %v96
    %v136 = vunpack.c.l.b16 %v97
    %v137 = vunpack.c.l.b16 %v98
    %v138 = vunpack.c.l.b16 %v99
    %v139 = vunpack.c.l.b16 %v100
    %v140 = vunpack.c.l.b16 %v101
    %v141 = vunpack.c.l.b16 %v102
    %v142 = vunpack.c.l.b16 %v103
    %v143 = vunpack.c.l.b16 %v104
    %v144 = vunpack.c.l.b16 %v105
    %v145 = vpack.c.b16 %v130, %v129
    %v146 = vpack.c.b16 %v132, %v131
    %v147 = vpack.c.b16 %v134, %v133
    %v148 = vpack.c.b16 %v136, %v135
    %v149 = vpack.c.b16 %v138, %v137
    %v150 = vpack.c.b16 %v140, %v139
    %v151 = vpack.c.b16 %v142, %v141
    %v152 = vpack.c.b16 %v144, %v143
    %161 = vmatprep.subr.bf16.mxu0 0
    %162 = vmatpush1.bf16.msra.mxu0 %v152
    %163 = vmatprep.subr.bf16.mxu0 0
    %164 = vmatpush1.bf16.msra.mxu0 %v151
    %165 = vmatprep.subr.bf16.mxu0 0
    %166 = vmatpush1.bf16.msra.mxu0 %v150
    %167 = vmatprep.subr.bf16.mxu0 0
    %168 = vmatpush1.bf16.msra.mxu0 %v149
    %169 = vmatprep.subr.bf16.mxu0 0
    %170 = vmatpush1.bf16.msra.mxu0 %v148
    %171 = vmatprep.subr.bf16.mxu0 0
    %172 = vmatpush1.bf16.msra.mxu0 %v147
    %173 = vmatprep.subr.bf16.mxu0 0
    %174 = vmatpush1.bf16.msra.mxu0 %v146
    %175 = vmatprep.subr.bf16.mxu0 0
    %176 = vmatpush1.bf16.msra.mxu0 %v145
    %177 = vmatprep.subr.bf16.mxu0 0
    %178 = vmatpush2.bf16.msra.mxu0 0
    %179 = vmatprep.subr.bf16.mxu0 0
    %180 = vmatpush2.bf16.msra.mxu0 0
    %181 = vmatprep.subr.bf16.mxu0 0
    %182 = vmatpush2.bf16.msra.mxu0 0
    %183 = vmatprep.subr.bf16.mxu0 0
    %184 = vmatpush2.bf16.msra.mxu0 0
    %185 = vmatprep.subr.bf16.mxu0 0
    %186 = vmatpush2.bf16.msra.mxu0 0
    %187 = vmatprep.subr.bf16.mxu0 0
    %188 = vmatpush2.bf16.msra.mxu0 0
    %189 = vmatprep.subr.bf16.mxu0 0
    %190 = vmatpush2.bf16.msra.mxu0 0
    %191 = vmatprep.subr.bf16.mxu0 0
    %192 = vmatpush2.bf16.msra.mxu0 0
    %193 = vmatprep.mubr.bf16.mxu0 0
    %194 = vmatmul.mubr.bf16.gmra.mxu0 %v89
    %v195 = vpop.f32.mrf.mxu0
    %v196 = vadd.f32 %v111, %v195
    %v197 = vpop.f32.mrf.mxu0
    %v198 = vpop.f32.mrf.mxu0
    %v199 = vpop.f32.mrf.mxu0
    %200 = vdwg.mxu0
    %v201 = vmax.f32 %v196, 0.0
    %v202 = vpack.c.bf16 %v201, %v201
    %v203 = vld [vmem:[%s4] sm:$0xf]
    %v204 = vld [vmem:[%s4 + $0x4] sm:$0xf]
    %v205 = vld [vmem:[%s4 + $0x8] sm:$0xf]
    %v206 = vld [vmem:[%s4 + $0xc] sm:$0xf]
    %v207 = vld [vmem:[%s4 + $0x10] sm:$0xf]
    %v208 = vld [vmem:[%s4 + $0x14] sm:$0xf]
    %v209 = vld [vmem:[%s4 + $0x18] sm:$0xf]
    %v210 = vld [vmem:[%s4 + $0x1c] sm:$0xf]
    %v211 = vld [vmem:[%s4 + $0x20] sm:$0xf]
    %v212 = vld [vmem:[%s4 + $0x24] sm:$0xf]
    %v213 = vld [vmem:[%s4 + $0x28] sm:$0xf]
    %v214 = vld [vmem:[%s4 + $0x2c] sm:$0xf]
    %v215 = vld [vmem:[%s4 + $0x30] sm:$0xf]
    %v216 = vld [vmem:[%s4 + $0x34] sm:$0xf]
    %v217 = vld [vmem:[%s4 + $0x38] sm:$0xf]
    %v218 = vld [vmem:[%s4 + $0x3c] sm:$0xf]
    %v219 = vld [vmem:[%s5] sm:$0x1]
    %v221 = vlaneseq
    %v222 = vshrl.u32 %v221, 7
    %v223 = vsub.s32 0, %v222
    %v224 = vrot.slane %v219, %v223
    %v242 = vunpack.c.l.b16 %v203
    %v243 = vunpack.c.l.b16 %v204
    %v244 = vunpack.c.l.b16 %v205
    %v245 = vunpack.c.l.b16 %v206
    %v246 = vunpack.c.l.b16 %v207
    %v247 = vunpack.c.l.b16 %v208
    %v248 = vunpack.c.l.b16 %v209
    %v249 = vunpack.c.l.b16 %v210
    %v250 = vunpack.c.l.b16 %v211
    %v251 = vunpack.c.l.b16 %v212
    %v252 = vunpack.c.l.b16 %v213
    %v253 = vunpack.c.l.b16 %v214
    %v254 = vunpack.c.l.b16 %v215
    %v255 = vunpack.c.l.b16 %v216
    %v256 = vunpack.c.l.b16 %v217
    %v257 = vunpack.c.l.b16 %v218
    %v258 = vpack.c.b16 %v243, %v242
    %v259 = vpack.c.b16 %v245, %v244
    %v260 = vpack.c.b16 %v247, %v246
    %v261 = vpack.c.b16 %v249, %v248
    %v262 = vpack.c.b16 %v251, %v250
    %v263 = vpack.c.b16 %v253, %v252
    %v264 = vpack.c.b16 %v255, %v254
    %v265 = vpack.c.b16 %v257, %v256
    %274 = vmatprep.subr.bf16.mxu0 0
    %275 = vmatpush1.bf16.msra.mxu0 %v265
    %276 = vmatprep.subr.bf16.mxu0 0
    %277 = vmatpush1.bf16.msra.mxu0 %v264
    %278 = vmatprep.subr.bf16.mxu0 0
    %279 = vmatpush1.bf16.msra.mxu0 %v263
    %280 = vmatprep.subr.bf16.mxu0 0
    %281 = vmatpush1.bf16.msra.mxu0 %v262
    %282 = vmatprep.subr.bf16.mxu0 0
    %283 = vmatpush1.bf16.msra.mxu0 %v261
    %284 = vmatprep.subr.bf16.mxu0 0
    %285 = vmatpush1.bf16.msra.mxu0 %v260
    %286 = vmatprep.subr.bf16.mxu0 0
    %287 = vmatpush1.bf16.msra.mxu0 %v259
    %288 = vmatprep.subr.bf16.mxu0 0
    %289 = vmatpush1.bf16.msra.mxu0 %v258
    %290 = vmatprep.subr.bf16.mxu0 0
    %291 = vmatpush2.bf16.msra.mxu0 0
    %292 = vmatprep.subr.bf16.mxu0 0
    %293 = vmatpush2.bf16.msra.mxu0 0
    %294 = vmatprep.subr.bf16.mxu0 0
    %295 = vmatpush2.bf16.msra.mxu0 0
    %296 = vmatprep.subr.bf16.mxu0 0
    %297 = vmatpush2.bf16.msra.mxu0 0
    %298 = vmatprep.subr.bf16.mxu0 0
    %299 = vmatpush2.bf16.msra.mxu0 0
    %300 = vmatprep.subr.bf16.mxu0 0
    %301 = vmatpush2.bf16.msra.mxu0 0
    %302 = vmatprep.subr.bf16.mxu0 0
    %303 = vmatpush2.bf16.msra.mxu0 0
    %304 = vmatprep.subr.bf16.mxu0 0
    %305 = vmatpush2.bf16.msra.mxu0 0
    %306 = vmatprep.mubr.bf16.mxu0 0
    %307 = vmatmul.mubr.bf16.gmra.mxu0 %v202
    %v308 = vpop.f32.mrf.mxu0
    %v309 = vadd.f32 %v224, %v308
    %v310 = vpop.f32.mrf.mxu0
    %v311 = vpop.f32.mrf.mxu0
    %v312 = vpop.f32.mrf.mxu0
    %313 = vdwg.mxu0
    %v314 = vmax.f32 %v309, 0.0
    %v315 = vpack.c.bf16 %v314, %v314
    %v316 = vld [vmem:[%s6] sm:$0xff]
    %v317 = vld [vmem:[%s6 + $0x8] sm:$0xff]
    %v318 = vld [vmem:[%s6 + $0x10] sm:$0xff]
    %v319 = vld [vmem:[%s6 + $0x18] sm:$0xff]
    %v320 = vld [vmem:[%s6 + $0x20] sm:$0xff]
    %v321 = vld [vmem:[%s6 + $0x28] sm:$0xff]
    %v322 = vld [vmem:[%s6 + $0x30] sm:$0xff]
    %v323 = vld [vmem:[%s6 + $0x38] sm:$0xff]
    %v324 = vld [vmem:[%s7] sm:$0x3]
    %v326 = vlaneseq
    %v327 = vshrl.u32 %v326, 7
    %v328 = vsub.s32 0, %v327
    %v329 = vrot.slane %v324, %v328
    %v330 = vlaneseq
    %v331 = vshrl.u32 %v330, 7
    %v332 = vsub.s32 1, %v331
    %v333 = vrot.slane %v324, %v332
    %v344 = vunpack.c.l.b16 %v316
    %v345 = vunpack.c.h.b16 %v316
    %v346 = vunpack.c.l.b16 %v317
    %v347 = vunpack.c.h.b16 %v317
    %v348 = vunpack.c.l.b16 %v318
    %v349 = vunpack.c.h.b16 %v318
    %v350 = vunpack.c.l.b16 %v319
    %v351 = vunpack.c.h.b16 %v319
    %v352 = vunpack.c.l.b16 %v320
    %v353 = vunpack.c.h.b16 %v320
    %v354 = vunpack.c.l.b16 %v321
    %v355 = vunpack.c.h.b16 %v321
    %v356 = vunpack.c.l.b16 %v322
    %v357 = vunpack.c.h.b16 %v322
    %v358 = vunpack.c.l.b16 %v323
    %v359 = vunpack.c.h.b16 %v323
    %v360 = vpack.c.b16 %v346, %v344
    %v361 = vpack.c.b16 %v347, %v345
    %v362 = vpack.c.b16 %v350, %v348
    %v363 = vpack.c.b16 %v351, %v349
    %v364 = vpack.c.b16 %v354, %v352
    %v365 = vpack.c.b16 %v355, %v353
    %v366 = vpack.c.b16 %v358, %v356
    %v367 = vpack.c.b16 %v359, %v357
    %vm376 = vcmask 523264
    %v378 = vsel %vm376, %v315, 0
    %380 = vmatprep.subr.bf16.mxu0 0
    %381 = vmatpush1.bf16.msra.mxu0 0
    %382 = vmatprep.subr.bf16.mxu0 0
    %383 = vmatpush1.bf16.msra.mxu0 0
    %384 = vmatprep.subr.bf16.mxu0 0
    %385 = vmatpush1.bf16.msra.mxu0 0
    %386 = vmatprep.subr.bf16.mxu0 0
    %387 = vmatpush1.bf16.msra.mxu0 0
    %388 = vmatprep.subr.bf16.mxu0 %v367
    %389 = vmatpush1.bf16.msra.mxu0 %v366
    %390 = vmatprep.subr.bf16.mxu0 %v365
    %391 = vmatpush1.bf16.msra.mxu0 %v364
    %392 = vmatprep.subr.bf16.mxu0 %v363
    %393 = vmatpush1.bf16.msra.mxu0 %v362
    %394 = vmatprep.subr.bf16.mxu0 %v361
    %395 = vmatpush1.bf16.msra.mxu0 %v360
    %396 = vmatprep.subr.bf16.mxu0 0
    %397 = vmatpush2.bf16.msra.mxu0 0
    %398 = vmatprep.subr.bf16.mxu0 0
    %399 = vmatpush2.bf16.msra.mxu0 0
    %400 = vmatprep.subr.bf16.mxu0 0
    %401 = vmatpush2.bf16.msra.mxu0 0
    %402 = vmatprep.subr.bf16.mxu0 0
    %403 = vmatpush2.bf16.msra.mxu0 0
    %404 = vmatprep.subr.bf16.mxu0 0
    %405 = vmatpush2.bf16.msra.mxu0 0
    %406 = vmatprep.subr.bf16.mxu0 0
    %407 = vmatpush2.bf16.msra.mxu0 0
    %408 = vmatprep.subr.bf16.mxu0 0
    %409 = vmatpush2.bf16.msra.mxu0 0
    %410 = vmatprep.subr.bf16.mxu0 0
    %411 = vmatpush2.bf16.msra.mxu0 0
    %412 = vmatprep.mubr.bf16.mxu0 0
    %413 = vmatmul.mubr.bf16.gmra.mxu0 %v378
    %v414 = vpop.f32.mrf.mxu0
    %v415 = vadd.f32 %v329, %v414
    %v416 = vpop.f32.mrf.mxu0
    %v417 = vadd.f32 %v333, %v416
    %v418 = vpop.f32.mrf.mxu0
    %v419 = vpop.f32.mrf.mxu0
    %420 = vdwg.mxu0
    %421 = vst [vmem:[#allocation9] sm:$0xff] %v415
    %422 = vst [vmem:[#allocation9 + $0x8] sm:$0xff] %v417
    %v423 = vld [vmem:[#allocation5] sm:$0xff]
    %v424 = vmul.f32 %v417, 0.5
    %v425 = vmul.f32 %v424, 1.442695
    %v426 = vpow.pop %v425
    %v427 = vmul.f32 %v423, %v426
    %v428 = vadd.f32 %v415, %v427
    %v429 = vpack.c.bf16 %v428, %v428
    %v430 = vld [vmem:[%s8] sm:$0xf]
    %v431 = vld [vmem:[%s8 + $0x4] sm:$0xf]
    %v432 = vld [vmem:[%s8 + $0x8] sm:$0xf]
    %v433 = vld [vmem:[%s8 + $0xc] sm:$0xf]
    %v434 = vld [vmem:[%s8 + $0x10] sm:$0xf]
    %v435 = vld [vmem:[%s8 + $0x14] sm:$0xf]
    %v436 = vld [vmem:[%s8 + $0x18] sm:$0xf]
    %v437 = vld [vmem:[%s8 + $0x1c] sm:$0xf]
    %v438 = vld [vmem:[%s8 + $0x20] sm:$0xf]
    %v439 = vld [vmem:[%s8 + $0x24] sm:$0xf]
    %v440 = vld [vmem:[%s8 + $0x28] sm:$0xf]
    %v441 = vld [vmem:[%s8 + $0x2c] sm:$0xf]
    %v442 = vld [vmem:[%s8 + $0x30] sm:$0xf]
    %v443 = vld [vmem:[%s8 + $0x34] sm:$0xf]
    %v444 = vld [vmem:[%s8 + $0x38] sm:$0xf]
    %v445 = vld [vmem:[%s8 + $0x3c] sm:$0xf]
    %v446 = vld [vmem:[%s9] sm:$0x1]
    %v448 = vlaneseq
    %v449 = vshrl.u32 %v448, 7
    %v450 = vsub.s32 0, %v449
    %v451 = vrot.slane %v446, %v450
    %v469 = vunpack.c.l.b16 %v430
    %v470 = vunpack.c.l.b16 %v431
    %v471 = vunpack.c.l.b16 %v432
    %v472 = vunpack.c.l.b16 %v433
    %v473 = vunpack.c.l.b16 %v434
    %v474 = vunpack.c.l.b16 %v435
    %v475 = vunpack.c.l.b16 %v436
    %v476 = vunpack.c.l.b16 %v437
    %v477 = vunpack.c.l.b16 %v438
    %v478 = vunpack.c.l.b16 %v439
    %v479 = vunpack.c.l.b16 %v440
    %v480 = vunpack.c.l.b16 %v441
    %v481 = vunpack.c.l.b16 %v442
    %v482 = vunpack.c.l.b16 %v443
    %v483 = vunpack.c.l.b16 %v444
    %v484 = vunpack.c.l.b16 %v445
    %v485 = vpack.c.b16 %v470, %v469
    %v486 = vpack.c.b16 %v472, %v471
    %v487 = vpack.c.b16 %v474, %v473
    %v488 = vpack.c.b16 %v476, %v475
    %v489 = vpack.c.b16 %v478, %v477
    %v490 = vpack.c.b16 %v480, %v479
    %v491 = vpack.c.b16 %v482, %v481
    %v492 = vpack.c.b16 %v484, %v483
    %501 = vmatprep.subr.bf16.mxu0 0
    %502 = vmatpush1.bf16.msra.mxu0 %v492
    %503 = vmatprep.subr.bf16.mxu0 0
    %504 = vmatpush1.bf16.msra.mxu0 %v491
    %505 = vmatprep.subr.bf16.mxu0 0
    %506 = vmatpush1.bf16.msra.mxu0 %v490
    %507 = vmatprep.subr.bf16.mxu0 0
    %508 = vmatpush1.bf16.msra.mxu0 %v489
    %509 = vmatprep.subr.bf16.mxu0 0
    %510 = vmatpush1.bf16.msra.mxu0 %v488
    %511 = vmatprep.subr.bf16.mxu0 0
    %512 = vmatpush1.bf16.msra.mxu0 %v487
    %513 = vmatprep.subr.bf16.mxu0 0
    %514 = vmatpush1.bf16.msra.mxu0 %v486
    %515 = vmatprep.subr.bf16.mxu0 0
    %516 = vmatpush1.bf16.msra.mxu0 %v485
    %517 = vmatprep.subr.bf16.mxu0 0
    %518 = vmatpush2.bf16.msra.mxu0 0
    %519 = vmatprep.subr.bf16.mxu0 0
    %520 = vmatpush2.bf16.msra.mxu0 0
    %521 = vmatprep.subr.bf16.mxu0 0
    %522 = vmatpush2.bf16.msra.mxu0 0
    %523 = vmatprep.subr.bf16.mxu0 0
    %524 = vmatpush2.bf16.msra.mxu0 0
    %525 = vmatprep.subr.bf16.mxu0 0
    %526 = vmatpush2.bf16.msra.mxu0 0
    %527 = vmatprep.subr.bf16.mxu0 0
    %528 = vmatpush2.bf16.msra.mxu0 0
    %529 = vmatprep.subr.bf16.mxu0 0
    %530 = vmatpush2.bf16.msra.mxu0 0
    %531 = vmatprep.subr.bf16.mxu0 0
    %532 = vmatpush2.bf16.msra.mxu0 0
    %533 = vmatprep.mubr.bf16.mxu0 0
    %534 = vmatmul.mubr.bf16.gmra.mxu0 %v429
    %v535 = vpop.f32.mrf.mxu0
    %v536 = vadd.f32 %v451, %v535
    %v537 = vpop.f32.mrf.mxu0
    %v538 = vpop.f32.mrf.mxu0
    %v539 = vpop.f32.mrf.mxu0
    %540 = vdwg.mxu0
    %v541 = vmax.f32 %v536, 0.0
    %v542 = vpack.c.bf16 %v541, %v541
    %v543 = vld [vmem:[#allocation7] sm:$0xf]
    %v544 = vld [vmem:[#allocation7 + $0x4] sm:$0xf]
    %v545 = vld [vmem:[#allocation7 + $0x8] sm:$0xf]
    %v546 = vld [vmem:[#allocation7 + $0xc] sm:$0xf]
    %v547 = vld [vmem:[#allocation7 + $0x10] sm:$0xf]
    %v548 = vld [vmem:[#allocation7 + $0x14] sm:$0xf]
    %v549 = vld [vmem:[#allocation7 + $0x18] sm:$0xf]
    %v550 = vld [vmem:[#allocation7 + $0x1c] sm:$0xf]
    %v551 = vld [vmem:[%s11] sm:$0x1]
    %v553 = vlaneseq
    %v554 = vshrl.u32 %v553, 7
    %v555 = vsub.s32 0, %v554
    %v556 = vrot.slane %v551, %v555
    %v566 = vunpack.c.l.b16 %v543
    %v567 = vunpack.c.l.b16 %v544
    %v568 = vunpack.c.l.b16 %v545
    %v569 = vunpack.c.l.b16 %v546
    %v570 = vunpack.c.l.b16 %v547
    %v571 = vunpack.c.l.b16 %v548
    %v572 = vunpack.c.l.b16 %v549
    %v573 = vunpack.c.l.b16 %v550
    %v574 = vpack.c.b16 %v567, %v566
    %v575 = vpack.c.b16 %v569, %v568
    %v576 = vpack.c.b16 %v571, %v570
    %v577 = vpack.c.b16 %v573, %v572
    %v583 = vsel %vm376, %v542, 0
    %585 = vmatprep.subr.bf16.mxu0 0
    %586 = vmatpush1.bf16.msra.mxu0 0
    %587 = vmatprep.subr.bf16.mxu0 0
    %588 = vmatpush1.bf16.msra.mxu0 0
    %589 = vmatprep.subr.bf16.mxu0 0
    %590 = vmatpush1.bf16.msra.mxu0 0
    %591 = vmatprep.subr.bf16.mxu0 0
    %592 = vmatpush1.bf16.msra.mxu0 0
    %593 = vmatprep.subr.bf16.mxu0 0
    %594 = vmatpush1.bf16.msra.mxu0 %v577
    %595 = vmatprep.subr.bf16.mxu0 0
    %596 = vmatpush1.bf16.msra.mxu0 %v576
    %597 = vmatprep.subr.bf16.mxu0 0
    %598 = vmatpush1.bf16.msra.mxu0 %v575
    %599 = vmatprep.subr.bf16.mxu0 0
    %600 = vmatpush1.bf16.msra.mxu0 %v574
    %601 = vmatprep.subr.bf16.mxu0 0
    %602 = vmatpush2.bf16.msra.mxu0 0
    %603 = vmatprep.subr.bf16.mxu0 0
    %604 = vmatpush2.bf16.msra.mxu0 0
    %605 = vmatprep.subr.bf16.mxu0 0
    %606 = vmatpush2.bf16.msra.mxu0 0
    %607 = vmatprep.subr.bf16.mxu0 0
    %608 = vmatpush2.bf16.msra.mxu0 0
    %609 = vmatprep.subr.bf16.mxu0 0
    %610 = vmatpush2.bf16.msra.mxu0 0
    %611 = vmatprep.subr.bf16.mxu0 0
    %612 = vmatpush2.bf16.msra.mxu0 0
    %613 = vmatprep.subr.bf16.mxu0 0
    %614 = vmatpush2.bf16.msra.mxu0 0
    %615 = vmatprep.subr.bf16.mxu0 0
    %616 = vmatpush2.bf16.msra.mxu0 0
    %617 = vmatprep.mubr.bf16.mxu0 0
    %618 = vmatmul.mubr.bf16.gmra.mxu0 %v583
    %v619 = vpop.f32.mrf.mxu0
    %v620 = vadd.f32 %v556, %v619
    %v621 = vpop.f32.mrf.mxu0
    %v622 = vpop.f32.mrf.mxu0
    %v623 = vpop.f32.mrf.mxu0
    %624 = vdwg.mxu0
    %v625 = vmax.f32 %v620, 0.0
    %v626 = vpack.c.bf16 %v625, %v625
    %v627 = vld [vmem:[%s12] sm:$0xf]
    %v628 = vld [vmem:[%s12 + $0x4] sm:$0xf]
    %v629 = vld [vmem:[%s12 + $0x8] sm:$0xf]
    %v630 = vld [vmem:[%s12 + $0xc] sm:$0xf]
    %v631 = vld [vmem:[%s12 + $0x10] sm:$0xf]
    %v632 = vld [vmem:[%s12 + $0x14] sm:$0xf]
    %v633 = vld [vmem:[%s12 + $0x18] sm:$0xf]
    %v634 = vld [vmem:[%s12 + $0x1c] sm:$0xf]
    %v635 = vld [vmem:[%s12 + $0x20] sm:$0xf]
    %v636 = vld [vmem:[%s12 + $0x24] sm:$0xf]
    %v637 = vld [vmem:[%s12 + $0x28] sm:$0xf]
    %v638 = vld [vmem:[%s12 + $0x2c] sm:$0xf]
    %v639 = vld [vmem:[%s12 + $0x30] sm:$0xf]
    %v640 = vld [vmem:[%s12 + $0x34] sm:$0xf]
    %v641 = vld [vmem:[%s12 + $0x38] sm:$0xf]
    %v642 = vld [vmem:[%s12 + $0x3c] sm:$0xf]
    %v643 = vld [vmem:[%s13] sm:$0x1]
    %v645 = vlaneseq
    %v646 = vshrl.u32 %v645, 7
    %v647 = vsub.s32 0, %v646
    %v648 = vrot.slane %v643, %v647
    %v666 = vunpack.c.l.b16 %v627
    %v667 = vunpack.c.l.b16 %v628
    %v668 = vunpack.c.l.b16 %v629
    %v669 = vunpack.c.l.b16 %v630
    %v670 = vunpack.c.l.b16 %v631
    %v671 = vunpack.c.l.b16 %v632
    %v672 = vunpack.c.l.b16 %v633
    %v673 = vunpack.c.l.b16 %v634
    %v674 = vunpack.c.l.b16 %v635
    %v675 = vunpack.c.l.b16 %v636
    %v676 = vunpack.c.l.b16 %v637
    %v677 = vunpack.c.l.b16 %v638
    %v678 = vunpack.c.l.b16 %v639
    %v679 = vunpack.c.l.b16 %v640
    %v680 = vunpack.c.l.b16 %v641
    %v681 = vunpack.c.l.b16 %v642
    %v682 = vpack.c.b16 %v667, %v666
    %v683 = vpack.c.b16 %v669, %v668
    %v684 = vpack.c.b16 %v671, %v670
    %v685 = vpack.c.b16 %v673, %v672
    %v686 = vpack.c.b16 %v675, %v674
    %v687 = vpack.c.b16 %v677, %v676
    %v688 = vpack.c.b16 %v679, %v678
    %v689 = vpack.c.b16 %v681, %v680
    %698 = vmatprep.subr.bf16.mxu0 0
    %699 = vmatpush1.bf16.msra.mxu0 %v689
    %700 = vmatprep.subr.bf16.mxu0 0
    %701 = vmatpush1.bf16.msra.mxu0 %v688
    %702 = vmatprep.subr.bf16.mxu0 0
    %703 = vmatpush1.bf16.msra.mxu0 %v687
    %704 = vmatprep.subr.bf16.mxu0 0
    %705 = vmatpush1.bf16.msra.mxu0 %v686
    %706 = vmatprep.subr.bf16.mxu0 0
    %707 = vmatpush1.bf16.msra.mxu0 %v685
    %708 = vmatprep.subr.bf16.mxu0 0
    %709 = vmatpush1.bf16.msra.mxu0 %v684
    %710 = vmatprep.subr.bf16.mxu0 0
    %711 = vmatpush1.bf16.msra.mxu0 %v683
    %712 = vmatprep.subr.bf16.mxu0 0
    %713 = vmatpush1.bf16.msra.mxu0 %v682
    %714 = vmatprep.subr.bf16.mxu0 0
    %715 = vmatpush2.bf16.msra.mxu0 0
    %716 = vmatprep.subr.bf16.mxu0 0
    %717 = vmatpush2.bf16.msra.mxu0 0
    %718 = vmatprep.subr.bf16.mxu0 0
    %719 = vmatpush2.bf16.msra.mxu0 0
    %720 = vmatprep.subr.bf16.mxu0 0
    %721 = vmatpush2.bf16.msra.mxu0 0
    %722 = vmatprep.subr.bf16.mxu0 0
    %723 = vmatpush2.bf16.msra.mxu0 0
    %724 = vmatprep.subr.bf16.mxu0 0
    %725 = vmatpush2.bf16.msra.mxu0 0
    %726 = vmatprep.subr.bf16.mxu0 0
    %727 = vmatpush2.bf16.msra.mxu0 0
    %728 = vmatprep.subr.bf16.mxu0 0
    %729 = vmatpush2.bf16.msra.mxu0 0
    %730 = vmatprep.mubr.bf16.mxu0 0
    %731 = vmatmul.mubr.bf16.gmra.mxu0 %v626
    %v732 = vpop.f32.mrf.mxu0
    %v733 = vadd.f32 %v648, %v732
    %v734 = vpop.f32.mrf.mxu0
    %v735 = vpop.f32.mrf.mxu0
    %v736 = vpop.f32.mrf.mxu0
    %737 = vdwg.mxu0
    %738 = vst [vmem:[#allocation8] sm:$0xff] %v733
    // Predicated region
    $region70: #{tpu_custom_call.1} parent=1 // pred_check
      _
    $region71: #{tpu_custom_call.1} parent=1 // pred_check_branch
      %740 = sbr.rel (0) target = $region73
    $region72: #{tpu_custom_call.1} parent=1 // pred_region
      %s742 = ssub.s32 128, 128
      %743 = vsyncadd [#allocation4], %s742
      %s745 = sshll.u32 [#allocation8], 4
      %s746 = int_to_ptr.vmem [resolvable:$true] %s745
      %748 = dma.vmem_to_hbm [thread:$0]  %s746, 128, %s14, [#allocation4]
    $region73: #{tpu_custom_call.1} parent=1 // pred_fallthru
      _
    // Predicated region
    $region74: #{tpu_custom_call.1} parent=1 // pred_check
      _
    $region75: #{tpu_custom_call.1} parent=1 // pred_check_branch
      %750 = sbr.rel (0) target = $region77
    $region76: #{tpu_custom_call.1} parent=1 // pred_region
      %s752 = ssub.s32 256, 256
      %753 = vsyncadd [#allocation10], %s752
      %s755 = sshll.u32 [#allocation9], 4
      %s756 = int_to_ptr.vmem [resolvable:$true] %s755
      %758 = dma.vmem_to_hbm [thread:$0]  %s756, 256, %s15, [#allocation10]
    $region77: #{tpu_custom_call.1} parent=1 // pred_fallthru
      _
    // Predicated region
    $region78: #{tpu_custom_call.1} parent=1 // pred_check
      _
    $region79: #{tpu_custom_call.1} parent=1 // pred_check_branch
      %760 = sbr.rel (0) target = $region81
    $region80: #{tpu_custom_call.1} parent=1 // pred_region
      %761 = dma.done [#allocation4], 128
    $region81: #{tpu_custom_call.1} parent=1 // pred_fallthru
      _
    // Predicated region
    $region82: #{tpu_custom_call.1} parent=1 // pred_check
      _
    $region83: #{tpu_custom_call.1} parent=1 // pred_check_branch
      %763 = sbr.rel (0) target = $region85
    $region84: #{tpu_custom_call.1} parent=1 // pred_region
      %764 = dma.done [#allocation10], 256
    $region85: #{tpu_custom_call.1} parent=1 // pred_fallthru
      _
    %765 = vsyncpa [#allocation3], 1
    %766 = vsyncpa [#allocation6], 1
    %767 = vsyncpa [#allocation4], 1
    %768 = vsyncpa [#allocation10], 1

</llo_original>
